<compile_context>
chip_gen: v7x
topology: tpu7x:2x2x1
jax: 0.10.0
libtpu: 0.0.40
codegen_flags: <defaults>
</compile_context>

<pallas_src>
import functools

import jax
import jax.numpy as jnp
from jax.experimental import pallas as pl
from jax.experimental.pallas import tpu as pltpu


def _svso_kernel(x_ref,        # (1, tn, F)  embeddings tile
                 g_ref,        # (1, 1, F)   per-batch global max (f32)
                 w1a_ref,      # (F, F)      conv1 weight, x half        (bf16)
                 w1b_ref,      # (F, F)      conv1 weight, global half   (bf16)
                 vf_ref,       # (3, F)      [b1; bn1_scale; bn1_shift]  (f32)
                 w2_ref,       # (F, H)      conv2 weight, BN2 folded    (bf16)
                 vh_ref,       # (2, H)      [b2'; w3 row]               (f32)
                 b3_ref,       # (1, 1)      conv3 bias                  (f32)
                 mixed_ref,    # (1, tn, F)  out
                 scores_ref):  # (1, tn, 1)  out
    x = x_ref[0].astype(jnp.bfloat16)                      # (tn, F)
    g = g_ref[0].astype(jnp.bfloat16)                      # (1, F)

    vf = vf_ref[...]
    b1, s1, t1 = vf[0:1, :], vf[1:2, :], vf[2:3, :]        # (1, F) each

    # conv1 split: mixed = x @ w1a + (g @ w1b + b1)  (global term broadcast over rows)
    gterm = jnp.dot(g, w1b_ref[...],
                    preferred_element_type=jnp.float32) + b1           # (1, F)
    mixed = jnp.dot(x, w1a_ref[...],
                    preferred_element_type=jnp.float32) + gterm        # (tn, F)
    mixed_ref[0] = mixed.astype(mixed_ref.dtype)

    # BN1 affine + ReLU (f32 on the VPU), then conv2 with BN2 folded into it.
    h = jnp.maximum(mixed * s1 + t1, 0.0)                              # (tn, F)
    h = jnp.dot(h.astype(jnp.bfloat16), w2_ref[...],
                preferred_element_type=jnp.float32)                    # (tn, H)

    vh = vh_ref[...]
    b2, w3 = vh[0:1, :], vh[1:2, :]                                    # (1, H) each
    h = jnp.maximum(h + b2, 0.0)                                       # (tn, H)

    # conv3 (H -> 1) as a VPU mul + cross-lane reduce (H is tiny).
    sc = jnp.sum(h * w3, axis=-1, keepdims=True) + b3_ref[...]         # (tn, 1)
    scores_ref[0] = sc.astype(scores_ref.dtype)


def _prepare_params(params):
    """Split conv1, fold BN2 into conv2, cast matmul weights to bf16, merge vectors."""
    w1t = params["w1t"]                       # (2F, F)
    F = w1t.shape[1]
    w1a = w1t[:F].astype(jnp.bfloat16)        # (F, F)   x half
    w1b = w1t[F:].astype(jnp.bfloat16)        # (F, F)   global half
    vecF = jnp.concatenate([params["b1"], params["s1"], params["t1"]], axis=0)  # (3, F)

    # BN2 fold:  (h @ w2 + b2) * s2 + t2  ==  h @ (w2*s2) + (b2*s2 + t2)
    w2f = (params["w2t"] * params["s2"]).astype(jnp.bfloat16)           # (F, H)
    b2f = params["b2"] * params["s2"] + params["t2"]                    # (1, H)
    w3row = params["w3t"].T                                             # (1, H)
    vecH = jnp.concatenate([b2f, w3row], axis=0)                        # (2, H)

    b3 = params["b3"]                                                   # (1, 1)
    return w1a, w1b, vecF, w2f, vecH, b3


def svso_forward(embeddings, params, *, tn=None):
    """embeddings: (B, N, F) float32; returns (sorted_indices, sorted_embeddings)."""
    B, N, F = embeddings.shape
    w1a, w1b, vecF, w2f, vecH, b3 = _prepare_params(params)
    H = w2f.shape[1]

    # N-tile size: whole N when small (block == full dim is always legal),
    # otherwise large multiple-of-8 tiles (~HBM-roofline sweet spot).
    if tn is None:
        tn = N if N <= 1024 else 1024
    n_tiles = pl.cdiv(N, tn)

    # Global max over the points axis (cheap XLA pre-pass; required once N is tiled).
    g = jnp.max(embeddings, axis=1)[:, None, :]            # (B, 1, F)

    def const(shape):
        return pl.BlockSpec(shape, lambda b, t, _s=len(shape): (0,) * _s)

    mixed, scores3 = pl.pallas_call(
        _svso_kernel,
        out_shape=(jax.ShapeDtypeStruct((B, N, F), jnp.float32),
                   jax.ShapeDtypeStruct((B, N, 1), jnp.float32)),
        grid_spec=pltpu.PrefetchScalarGridSpec(
            num_scalar_prefetch=0,
            grid=(B, n_tiles),                             # B outer, N tiles inner
            in_specs=[
                pl.BlockSpec((1, tn, F), lambda b, t: (b, t, 0)),   # x tile
                pl.BlockSpec((1, 1, F), lambda b, t: (b, 0, 0)),    # global max
                const((F, F)),                                      # w1a
                const((F, F)),                                      # w1b
                const((3, F)),                                      # [b1; s1; t1]
                const((F, H)),                                      # w2 (BN2 folded)
                const((2, H)),                                      # [b2'; w3]
                const((1, 1)),                                      # b3
            ],
            out_specs=[
                pl.BlockSpec((1, tn, F), lambda b, t: (b, t, 0)),
                pl.BlockSpec((1, tn, 1), lambda b, t: (b, t, 0)),
            ],
        ),
        compiler_params=pltpu.CompilerParams(
            dimension_semantics=("parallel", "parallel"),
            vmem_limit_bytes=32 * 1024 * 1024),
    )(embeddings, g, w1a, w1b, vecF, w2f, vecH, b3)

    scores = scores3[..., 0]                               # (B, N)

    # TODO(synk): argsort + gather stay in XLA glue; tie-breaking of equal scores
    # may differ from torch.argsort(descending=True).
    sorted_indices = jnp.argsort(-scores, axis=1).astype(jnp.int32)
    sorted_embeddings = jnp.take_along_axis(
        mixed, sorted_indices[..., None], axis=1)          # (B, N, F)
    return sorted_indices, sorted_embeddings


def make_params(key, features_in, down_mlp_channels):
    assert len(down_mlp_channels) == 3
    assert down_mlp_channels[0] == features_in
    F = features_in
    C0, C1, C2 = down_mlp_channels
    eps = 1e-5
    ks = jax.random.split(key, 14)

    def rnd(k, shape, scale=0.1):
        return scale * jax.random.normal(k, shape, dtype=jnp.float32)

    # Conv1d(k=1) weights stored transposed: (in, out)
    w1t = rnd(ks[0], (2 * F, C0))
    b1 = rnd(ks[1], (1, C0))
    w2t = rnd(ks[2], (C0, C1))
    b2 = rnd(ks[3], (1, C1))
    w3t = rnd(ks[4], (C1, C2))
    b3 = rnd(ks[5], (1, C2))

    # BatchNorm1d (inference form): gamma, beta, running mean/var
    g1 = 1.0 + rnd(ks[6], (1, C0)); be1 = rnd(ks[7], (1, C0))
    m1 = rnd(ks[8], (1, C0)); v1 = 1.0 + 0.1 * jnp.abs(rnd(ks[9], (1, C0)))
    g2 = 1.0 + rnd(ks[10], (1, C1)); be2 = rnd(ks[11], (1, C1))
    m2 = rnd(ks[12], (1, C1)); v2 = 1.0 + 0.1 * jnp.abs(rnd(ks[13], (1, C1)))

    s1 = g1 / jnp.sqrt(v1 + eps); t1 = be1 - m1 * s1
    s2 = g2 / jnp.sqrt(v2 + eps); t2 = be2 - m2 * s2

    return dict(w1t=w1t, b1=b1, s1=s1, t1=t1,
                w2t=w2t, b2=b2, s2=s2, t2=t2,
                w3t=w3t, b3=b3)


def _reference_matched(embeddings, params):
    """Pure-JAX reference that mirrors the kernel's math (split conv1, BN2 fold,
    bf16 MXU operands, f32 accumulation)."""
    w1a, w1b, vecF, w2f, vecH, b3 = _prepare_params(params)
    x16 = embeddings.astype(jnp.bfloat16)
    g16 = jnp.max(embeddings, axis=1).astype(jnp.bfloat16)            # (B, F)
    gterm = jnp.einsum("bf,fo->bo", g16, w1b,
                       preferred_element_type=jnp.float32) + vecF[0]
    mixed = jnp.einsum("bnf,fo->bno", x16, w1a,
                       preferred_element_type=jnp.float32) + gterm[:, None, :]
    h = jnp.maximum(mixed * vecF[1] + vecF[2], 0.0)
    h = jnp.einsum("bnf,fh->bnh", h.astype(jnp.bfloat16), w2f,
                   preferred_element_type=jnp.float32)
    h = jnp.maximum(h + vecH[0], 0.0)
    scores = jnp.sum(h * vecH[1], axis=-1) + b3[0, 0]
    idx = jnp.argsort(-scores, axis=1).astype(jnp.int32)
    semb = jnp.take_along_axis(mixed, idx[..., None], axis=1)
    return idx, semb


def _reference_f32(embeddings, p):
    """Original (unfused, full f32) module math, for a sanity check on `mixed`."""
    g = jnp.max(embeddings, axis=1, keepdims=True)
    cat = jnp.concatenate(
        [embeddings, jnp.broadcast_to(g, embeddings.shape)], axis=-1)
    mixed = jnp.einsum("bnf,fo->bno", cat, p["w1t"]) + p["b1"][0]
    h = jnp.maximum(mixed * p["s1"][0] + p["t1"][0], 0.0)
    h = jnp.einsum("bnf,fo->bno", h, p["w2t"]) + p["b2"][0]
    h = jnp.maximum(h * p["s2"][0] + p["t2"][0], 0.0)
    scores = (jnp.einsum("bnh,ho->bno", h, p["w3t"]) + p["b3"][0])[..., 0]
    return mixed, scores


if __name__ == "__main__":
    B, N, F, H = 2, 8, 32, 16
    down_mlp_channels = (F, H, 1)

    key = jax.random.PRNGKey(0)
    k_x, k_p = jax.random.split(key)
    embeddings = jax.random.normal(k_x, (B, N, F), dtype=jnp.float32)
    params = make_params(k_p, F, down_mlp_channels)

    fwd = jax.jit(functools.partial(svso_forward, params=params))
    sorted_indices, sorted_embeddings = fwd(embeddings)
    jax.block_until_ready((sorted_indices, sorted_embeddings))

    assert sorted_indices.shape == (B, N)
    assert sorted_embeddings.shape == (B, N, F)

    # 1) exact-structure check against a precision-matched JAX reference.
    ridx, rsemb = _reference_matched(embeddings, params)
    assert jnp.array_equal(sorted_indices, ridx)
    assert jnp.allclose(sorted_embeddings, rsemb, atol=2e-3, rtol=2e-3)

    # 2) sanity vs. the original full-f32 module math (bf16 MXU tolerance);
    #    compare gathered-with-kernel-indices rows to avoid tie-order sensitivity.
    fmixed, _ = _reference_f32(embeddings, params)
    f32_gather = jnp.take_along_axis(fmixed, sorted_indices[..., None], axis=1)
    assert jnp.allclose(sorted_embeddings, f32_gather, atol=5e-2, rtol=5e-2)

    print("KERNEL_OK")
</pallas_src>

<mosaic_0001>
module attributes {stable_mosaic.version = 11 : i64} {
  func.func @_svso_kernel(%arg0: i32, %arg1: i32, %arg2: memref<1x8x32xf32, #tpu.memory_space<vmem>>, %arg3: memref<1x1x32xf32, #tpu.memory_space<vmem>>, %arg4: memref<32x32xbf16, #tpu.memory_space<vmem>>, %arg5: memref<32x32xbf16, #tpu.memory_space<vmem>>, %arg6: memref<3x32xf32, #tpu.memory_space<vmem>>, %arg7: memref<32x16xbf16, #tpu.memory_space<vmem>>, %arg8: memref<2x16xf32, #tpu.memory_space<vmem>>, %arg9: memref<1x1xf32, #tpu.memory_space<vmem>>, %arg10: memref<1x8x32xf32, #tpu.memory_space<vmem>>, %arg11: memref<1x8x1xf32, #tpu.memory_space<vmem>>) attributes {dimension_semantics = [#tpu.dimension_semantics<parallel>, #tpu.dimension_semantics<parallel>], iteration_bounds = array<i64: 2, 1>, scalar_prefetch = 0 : i64, scratch_operands = 0 : i64, tpu.core_type = #tpu.core_type<tc>, window_params = [{transform_indices = @transform_0, window_bounds = array<i64: 1, 8, 32>}, {transform_indices = @transform_1, window_bounds = array<i64: 1, 1, 32>}, {pipeline_mode = #tpu.pipeline_mode<synchronous>, transform_indices = @transform_2, window_bounds = array<i64: 32, 32>}, {pipeline_mode = #tpu.pipeline_mode<synchronous>, transform_indices = @transform_3, window_bounds = array<i64: 32, 32>}, {pipeline_mode = #tpu.pipeline_mode<synchronous>, transform_indices = @transform_4, window_bounds = array<i64: 3, 32>}, {pipeline_mode = #tpu.pipeline_mode<synchronous>, transform_indices = @transform_5, window_bounds = array<i64: 32, 16>}, {pipeline_mode = #tpu.pipeline_mode<synchronous>, transform_indices = @transform_6, window_bounds = array<i64: 2, 16>}, {pipeline_mode = #tpu.pipeline_mode<synchronous>, transform_indices = @transform_7, window_bounds = array<i64: 1, 1>}, {transform_indices = @transform_8, window_bounds = array<i64: 1, 8, 32>}, {transform_indices = @transform_9, window_bounds = array<i64: 1, 8, 1>}]} {
    %c0 = arith.constant 0 : index
    %c0_0 = arith.constant 0 : index
    %c0_1 = arith.constant 0 : index
    %0 = vector.load %arg2[%c0, %c0_0, %c0_1] : memref<1x8x32xf32, #tpu.memory_space<vmem>>, vector<1x8x32xf32>
    %1 = vector.shape_cast %0 : vector<1x8x32xf32> to vector<8x32xf32>
    %2 = arith.truncf %1 : vector<8x32xf32> to vector<8x32xbf16>
    %c0_2 = arith.constant 0 : index
    %c0_3 = arith.constant 0 : index
    %c0_4 = arith.constant 0 : index
    %3 = vector.load %arg3[%c0_2, %c0_3, %c0_4] : memref<1x1x32xf32, #tpu.memory_space<vmem>>, vector<1x1x32xf32>
    %4 = vector.shape_cast %3 : vector<1x1x32xf32> to vector<1x32xf32>
    %5 = arith.truncf %4 : vector<1x32xf32> to vector<1x32xbf16>
    %c0_5 = arith.constant 0 : index
    %c0_6 = arith.constant 0 : index
    %6 = vector.load %arg6[%c0_5, %c0_6] : memref<3x32xf32, #tpu.memory_space<vmem>>, vector<3x32xf32>
    %7 = vector.extract_strided_slice %6 {offsets = [0, 0], sizes = [1, 32], strides = [1, 1]} : vector<3x32xf32> to vector<1x32xf32>
    %8 = vector.extract_strided_slice %6 {offsets = [1, 0], sizes = [1, 32], strides = [1, 1]} : vector<3x32xf32> to vector<1x32xf32>
    %9 = vector.extract_strided_slice %6 {offsets = [2, 0], sizes = [1, 32], strides = [1, 1]} : vector<3x32xf32> to vector<1x32xf32>
    %c0_7 = arith.constant 0 : index
    %c0_8 = arith.constant 0 : index
    %10 = vector.load %arg5[%c0_7, %c0_8] : memref<32x32xbf16, #tpu.memory_space<vmem>>, vector<32x32xbf16>
    %cst = arith.constant dense<0.000000e+00> : vector<1x32xf32>
    %11 = tpu.matmul %5, %10, %cst {dimension_numbers = #tpu.dot_dimension_numbers<[1], [0], [0], [1], [0, 0, 1, 1], [], []>} : vector<1x32xbf16>, vector<32x32xbf16>, vector<1x32xf32> -> vector<1x32xf32>
    %12 = arith.addf %11, %7 : vector<1x32xf32>
    %c0_9 = arith.constant 0 : index
    %c0_10 = arith.constant 0 : index
    %13 = vector.load %arg4[%c0_9, %c0_10] : memref<32x32xbf16, #tpu.memory_space<vmem>>, vector<32x32xbf16>
    %cst_11 = arith.constant dense<0.000000e+00> : vector<8x32xf32>
    %14 = tpu.matmul %2, %13, %cst_11 {dimension_numbers = #tpu.dot_dimension_numbers<[1], [0], [0], [1], [0, 0, 1, 1], [], []>} : vector<8x32xbf16>, vector<32x32xbf16>, vector<8x32xf32> -> vector<8x32xf32>
    %15 = vector.broadcast %12 : vector<1x32xf32> to vector<8x32xf32>
    %16 = arith.addf %14, %15 : vector<8x32xf32>
    %c0_12 = arith.constant 0 : index
    %c0_13 = arith.constant 0 : index
    %c0_14 = arith.constant 0 : index
    %17 = vector.load %arg10[%c0_12, %c0_13, %c0_14] : memref<1x8x32xf32, #tpu.memory_space<vmem>>, vector<1x8x32xf32>
    %18 = vector.shape_cast %17 : vector<1x8x32xf32> to vector<8x32xf32>
    %19 = vector.shape_cast %16 : vector<8x32xf32> to vector<1x8x32xf32>
    tpu.vector_store %arg10[%c0_12, %c0_13, %c0_14], %19 {strides = array<i32>} : memref<1x8x32xf32, #tpu.memory_space<vmem>>, vector<1x8x32xf32>,
    %20 = vector.broadcast %8 : vector<1x32xf32> to vector<8x32xf32>
    %21 = arith.mulf %16, %20 : vector<8x32xf32>
    %22 = vector.broadcast %9 : vector<1x32xf32> to vector<8x32xf32>
    %23 = arith.addf %21, %22 : vector<8x32xf32>
    %cst_15 = arith.constant 0.000000e+00 : f32
    %24 = vector.broadcast %cst_15 : f32 to vector<8x32xf32>
    %25 = arith.maximumf %23, %24 : vector<8x32xf32>
    %26 = arith.truncf %25 : vector<8x32xf32> to vector<8x32xbf16>
    %c0_16 = arith.constant 0 : index
    %c0_17 = arith.constant 0 : index
    %27 = vector.load %arg7[%c0_16, %c0_17] : memref<32x16xbf16, #tpu.memory_space<vmem>>, vector<32x16xbf16>
    %cst_18 = arith.constant dense<0.000000e+00> : vector<8x16xf32>
    %28 = tpu.matmul %26, %27, %cst_18 {dimension_numbers = #tpu.dot_dimension_numbers<[1], [0], [0], [1], [0, 0, 1, 1], [], []>} : vector<8x32xbf16>, vector<32x16xbf16>, vector<8x16xf32> -> vector<8x16xf32>
    %c0_19 = arith.constant 0 : index
    %c0_20 = arith.constant 0 : index
    %29 = vector.load %arg8[%c0_19, %c0_20] : memref<2x16xf32, #tpu.memory_space<vmem>>, vector<2x16xf32>
    %30 = vector.extract_strided_slice %29 {offsets = [0, 0], sizes = [1, 16], strides = [1, 1]} : vector<2x16xf32> to vector<1x16xf32>
    %31 = vector.extract_strided_slice %29 {offsets = [1, 0], sizes = [1, 16], strides = [1, 1]} : vector<2x16xf32> to vector<1x16xf32>
    %32 = vector.broadcast %30 : vector<1x16xf32> to vector<8x16xf32>
    %33 = arith.addf %28, %32 : vector<8x16xf32>
    %cst_21 = arith.constant 0.000000e+00 : f32
    %34 = vector.broadcast %cst_21 : f32 to vector<8x16xf32>
    %35 = arith.maximumf %33, %34 : vector<8x16xf32>
    %36 = vector.broadcast %31 : vector<1x16xf32> to vector<8x16xf32>
    %37 = arith.mulf %35, %36 : vector<8x16xf32>
    %cst_22 = arith.constant dense<0.000000e+00> : vector<8xf32>
    %38 = vector.multi_reduction <add>, %37, %cst_22 [1] : vector<8x16xf32> to vector<8xf32>
    %39 = vector.shape_cast %38 : vector<8xf32> to vector<8x1xf32>
    %c0_23 = arith.constant 0 : index
    %c0_24 = arith.constant 0 : index
    %40 = vector.load %arg9[%c0_23, %c0_24] : memref<1x1xf32, #tpu.memory_space<vmem>>, vector<1x1xf32>
    %41 = vector.broadcast %40 : vector<1x1xf32> to vector<8x1xf32>
    %42 = arith.addf %39, %41 : vector<8x1xf32>
    %c0_25 = arith.constant 0 : index
    %c0_26 = arith.constant 0 : index
    %c0_27 = arith.constant 0 : index
    %43 = vector.load %arg11[%c0_25, %c0_26, %c0_27] : memref<1x8x1xf32, #tpu.memory_space<vmem>>, vector<1x8x1xf32>
    %44 = vector.shape_cast %43 : vector<1x8x1xf32> to vector<8x1xf32>
    %45 = vector.shape_cast %42 : vector<8x1xf32> to vector<1x8x1xf32>
    tpu.vector_store %arg11[%c0_25, %c0_26, %c0_27], %45 {strides = array<i32>} : memref<1x8x1xf32, #tpu.memory_space<vmem>>, vector<1x8x1xf32>,
    return
  }
  func.func @transform_0(%arg0: i32, %arg1: i32) -> (i32, i32, i32) {
    %c0_i32 = arith.constant 0 : i32
    %c0_i32_0 = arith.constant 0 : i32
    return %arg0, %arg1, %c0_i32 : i32, i32, i32
  }
  func.func @transform_1(%arg0: i32, %arg1: i32) -> (i32, i32, i32) {
    %c0_i32 = arith.constant 0 : i32
    %c0_i32_0 = arith.constant 0 : i32
    %c0_i32_1 = arith.constant 0 : i32
    return %arg0, %c0_i32, %c0_i32_0 : i32, i32, i32
  }
  func.func @transform_2(%arg0: i32, %arg1: i32) -> (i32, i32) {
    %c0_i32 = arith.constant 0 : i32
    %c0_i32_0 = arith.constant 0 : i32
    %c0_i32_1 = arith.constant 0 : i32
    return %c0_i32, %c0_i32_0 : i32, i32
  }
  func.func @transform_3(%arg0: i32, %arg1: i32) -> (i32, i32) {
    %c0_i32 = arith.constant 0 : i32
    %c0_i32_0 = arith.constant 0 : i32
    %c0_i32_1 = arith.constant 0 : i32
    return %c0_i32, %c0_i32_0 : i32, i32
  }
  func.func @transform_4(%arg0: i32, %arg1: i32) -> (i32, i32) {
    %c0_i32 = arith.constant 0 : i32
    %c0_i32_0 = arith.constant 0 : i32
    %c0_i32_1 = arith.constant 0 : i32
    return %c0_i32, %c0_i32_0 : i32, i32
  }
  func.func @transform_5(%arg0: i32, %arg1: i32) -> (i32, i32) {
    %c0_i32 = arith.constant 0 : i32
    %c0_i32_0 = arith.constant 0 : i32
    %c0_i32_1 = arith.constant 0 : i32
    return %c0_i32, %c0_i32_0 : i32, i32
  }
  func.func @transform_6(%arg0: i32, %arg1: i32) -> (i32, i32) {
    %c0_i32 = arith.constant 0 : i32
    %c0_i32_0 = arith.constant 0 : i32
    %c0_i32_1 = arith.constant 0 : i32
    return %c0_i32, %c0_i32_0 : i32, i32
  }
  func.func @transform_7(%arg0: i32, %arg1: i32) -> (i32, i32) {
    %c0_i32 = arith.constant 0 : i32
    %c0_i32_0 = arith.constant 0 : i32
    %c0_i32_1 = arith.constant 0 : i32
    return %c0_i32, %c0_i32_0 : i32, i32
  }
  func.func @transform_8(%arg0: i32, %arg1: i32) -> (i32, i32, i32) {
    %c0_i32 = arith.constant 0 : i32
    %c0_i32_0 = arith.constant 0 : i32
    return %arg0, %arg1, %c0_i32 : i32, i32, i32
  }
  func.func @transform_9(%arg0: i32, %arg1: i32) -> (i32, i32, i32) {
    %c0_i32 = arith.constant 0 : i32
    %c0_i32_0 = arith.constant 0 : i32
    return %arg0, %arg1, %c0_i32 : i32, i32, i32
  }
}

</mosaic_0001>

<llo_original>
// kernel: neg.0
$region0: #{neg.0}
  #allocation0 [shape = 's32[1]{0}', space=sflag, size = 0x4, scoped, tag = 'scoped memory for neg.0']
  %s0 = inlined_call_operand.vmem [shape: f32[2,8,1], index: 0, kind: input, shape index: {}]
  %s1 = inlined_call_operand.vmem [shape: f32[2,8,1], index: 1, kind: output, shape index: {}]
  %v2 = vld [vmem:[%s0] sm:$0xff]
  %3 = xla_tuple %v2
  %4 = xla_tuple %3
  %v5 = vxor.u32 %v2, 2147483648
  %6 = xla_tuple %v5
  %7 = vst [vmem:[%s1] sm:$0xff] %v5
  %s8 = scalar_lea.vmem %s0, 8
  %v9 = vld [vmem:[%s8] sm:$0xff]
  %10 = xla_tuple %v9
  %11 = xla_tuple %10
  %v12 = vxor.u32 %v9, 2147483648
  %13 = xla_tuple %v12
  %s14 = scalar_lea.vmem %s1, 8
  %15 = vst [vmem:[%s14] sm:$0xff] %v12

// kernel: svso_forward.1
$region0: #{svso_forward.1}
  #allocation0 [shape = 'u32[]', space=smem, size = 0x4, offset = 0x4, fixed_abs, tag = 'smem constant byte address 0x4 - core index']
  #allocation1 [shape = 'u32[144,128]{1,0:T(1,128)}', space=vmem, size = 0x12000, scoped, tag = 'internal scratch']
  #allocation2 [shape = 'f32[1,1]{1,0:T(1,128)S(1)}', space=vmem, size = 0x200, scoped, tag = 'scoped memory for svso_forward.1']
  %s0 = inlined_call_operand.vmem [shape: f32[2,8,32], index: 0, kind: input, shape index: {}]
  %s1 = inlined_call_operand.vmem [shape: f32[2,1,32], index: 1, kind: input, shape index: {}]
  %s2 = inlined_call_operand.vmem [shape: bf16[32,32], index: 2, kind: input, shape index: {}]
  %s3 = inlined_call_operand.vmem [shape: bf16[32,32], index: 3, kind: input, shape index: {}]
  %s4 = inlined_call_operand.hbm [shape: f32[3,32], index: 4, kind: input, shape index: {}]
  %s5 = inlined_call_operand.hbm [shape: bf16[32,16], index: 5, kind: input, shape index: {}]
  %s6 = inlined_call_operand.hbm [shape: f32[2,16], index: 6, kind: input, shape index: {}]
  %s7 = inlined_call_operand.<no memory space> [shape: f32[1,1], index: 7, kind: input, shape index: {}]
  %s8 = inlined_call_operand.vmem [shape: f32[2,8,32], index: 8, kind: output, shape index: {0}]
  %s9 = inlined_call_operand.vmem [shape: f32[2,8,1], index: 9, kind: output, shape index: {1}]
  %10 = xla_tuple %s8, %s9
  %s11 = sld [smem:[#allocation0]]
  $region85: #{svso_forward.1} parent=0
    _
  %s13 = ssub.s32 1, %s11
  %s14 = scalar_select 0, %s13, %s11
  %v15 = vstv %s7
  %16 = vst [vmem:[#allocation2] sm:$0x1] %v15
  $region1: #{svso_forward.1} parent=0
    #allocation3 [shape = 'u8[2048]{0}', space=vmem, size = 0x800, scoped, tag = 'input window, operand 4, single buffered']
    #allocation4 [shape = 's32[2]{0}', space=sflag, size = 0x8, scoped, tag = 'scoped memory for svso_forward.1']
    #allocation5 [shape = 'u8[8192]{0}', space=vmem, size = 0x2000, scoped, tag = 'input window, operand 5, single buffered']
    #allocation6 [shape = 's32[1]{0}', space=sflag, size = 0x4, scoped, tag = 'scoped memory for svso_forward.1']
    #allocation7 [shape = 'u8[1024]{0}', space=vmem, size = 0x400, scoped, tag = 'input window, operand 6, single buffered']
    %17 = vsyncpa [#allocation4], 0
    %18 = vsyncpa [#allocation6], 0
    loop: start=0, step=1, limit=4
    $region2: #{svso_forward.1} parent=1 // loop_pre_header
      _
    $region3: #{svso_forward.1} parent=1 // loop_header
      %s20 = sphi 0, %s24
      %p21 = scmp.ge.s32.totalorder %s20, 4
      %s27 = sphi 0, %s39
      %s28 = sphi 0, %s35
      %s29 = sphi 0, %s27
      %s30 = sphi 0, %s28
      %s31 = sphi 0, %s29
      %s32 = sphi 0, %s30
      %s44 = sphi 0, %s46
      %s47 = sphi 0, %s44
      %s48 = sphi 0, %s47
      %s64 = sphi 0, %s48
      %s70 = sphi 0, %s72
      %s73 = sphi 0, %s70
      %s74 = sphi 0, %s73
      %s90 = sphi 0, %s74
      %s94 = sphi 0, %s94
      %s96 = sphi 0, %s94
      %s97 = sphi 0, %s96
      %s111 = sphi 0, %s97
      %s115 = sphi 0, %s115
      %s117 = sphi 0, %s115
      %s118 = sphi 0, %s117
      %s132 = sphi 0, %s118
      %s136 = sphi 0, %s136
      %s138 = sphi 0, %s136
      %s139 = sphi 0, %s138
      %s153 = sphi 0, %s139
      %s157 = sphi 0, %s157
      %s159 = sphi 0, %s157
      %s160 = sphi 0, %s159
      %s174 = sphi 0, %s160
      %s178 = sphi 0, %s178
      %s180 = sphi 0, %s178
      %s181 = sphi 0, %s180
      %s195 = sphi 0, %s181
      %s199 = sphi 0, %s199
      %s201 = sphi 0, %s199
      %s202 = sphi 0, %s201
      %s216 = sphi 0, %s202
      %s224 = sphi 0, %s226
      %s227 = sphi 0, %s224
      %s228 = sphi 0, %s227
      %s244 = sphi 0, %s228
      %s252 = sphi 0, %s254
      %s255 = sphi 0, %s252
      %s256 = sphi 0, %s255
      %s272 = sphi 0, %s256
    $region4: #{svso_forward.1} parent=1 // loop_header_branch
      %23 = sbr.rel (%p21) target = $region8
    $region5: #{svso_forward.1} parent=1 // loop_body
      %s25 = ssub.s32 %s20, 1
      %s26 = ssub.s32 %s20, 2
      %s33 = sadd.s32 1, %s28
      %p34 = scmp.ge.s32.totalorder %s33, 1
      %s35 = scalar_select %p34, 0, %s33
      %s36 = sadd.s32 1, %s27
      %s37 = scalar_select %p34, %s36, %s27
      %p38 = scmp.ge.s32.totalorder %s37, 2
      %s39 = scalar_select %p38, 0, %s37
      %s40 = ssub.s32 %s27, %s39
      %s41 = ssub.s32 %s28, %s35
      %s42 = sor.u32 %s40, %s41
      %p43 = scmp.eq.s32.totalorder %s42, 0
      %s45 = sadd.s32 %s44, 1
      %s46 = scalar_select %p43, %s44, %s45
      %p49 = pneg %p43
      %p50 = scmp.eq.s32.totalorder %s20, 1
      %p51 = por %p49, %p50
      %p52 = scmp.ne.s32.totalorder %s44, %s47
      %p53 = scmp.eq.s32.totalorder %s20, 0
      %p54 = por %p52, %p53
      %p55 = scmp.ne.s32.totalorder %s44, %s47
      %p56 = scmp.eq.s32.totalorder %s25, 1
      %p57 = por %p55, %p56
      %p58 = scmp.ne.s32.totalorder %s47, %s48
      %p59 = scmp.eq.s32.totalorder %s25, 0
      %p60 = por %p58, %p59
      %p61 = scmp.ne.s32.totalorder %s47, %s48
      %p62 = scmp.eq.s32.totalorder %s26, 1
      %p63 = por %p61, %p62
      %p65 = scmp.ne.s32.totalorder %s48, %s64
      %p66 = scmp.eq.s32.totalorder %s26, 0
      %p67 = por %p65, %p66
      %s68 = ssub.s32 %s27, %s39
      %p69 = scmp.eq.s32.totalorder %s68, 0
      %s71 = sadd.s32 %s70, 1
      %s72 = scalar_select %p69, %s70, %s71
      %p75 = pneg %p69
      %p76 = scmp.eq.s32.totalorder %s20, 1
      %p77 = por %p75, %p76
      %p78 = scmp.ne.s32.totalorder %s70, %s73
      %p79 = scmp.eq.s32.totalorder %s20, 0
      %p80 = por %p78, %p79
      %p81 = scmp.ne.s32.totalorder %s70, %s73
      %p82 = scmp.eq.s32.totalorder %s25, 1
      %p83 = por %p81, %p82
      %p84 = scmp.ne.s32.totalorder %s73, %s74
      %p85 = scmp.eq.s32.totalorder %s25, 0
      %p86 = por %p84, %p85
      %p87 = scmp.ne.s32.totalorder %s73, %s74
      %p88 = scmp.eq.s32.totalorder %s26, 1
      %p89 = por %p87, %p88
      %p91 = scmp.ne.s32.totalorder %s74, %s90
      %p92 = scmp.eq.s32.totalorder %s26, 0
      %p93 = por %p91, %p92
      %s95 = sadd.s32 %s94, 1
      %p98 = scmp.eq.s32.totalorder %s20, 1
      %p99 = scmp.ne.s32.totalorder %s94, %s96
      %p100 = scmp.eq.s32.totalorder %s20, 0
      %p101 = por %p99, %p100
      %p102 = scmp.ne.s32.totalorder %s94, %s96
      %p103 = scmp.eq.s32.totalorder %s25, 1
      %p104 = por %p102, %p103
      %p105 = scmp.ne.s32.totalorder %s96, %s97
      %p106 = scmp.eq.s32.totalorder %s25, 0
      %p107 = por %p105, %p106
      %p108 = scmp.ne.s32.totalorder %s96, %s97
      %p109 = scmp.eq.s32.totalorder %s26, 1
      %p110 = por %p108, %p109
      %p112 = scmp.ne.s32.totalorder %s97, %s111
      %p113 = scmp.eq.s32.totalorder %s26, 0
      %p114 = por %p112, %p113
      %s116 = sadd.s32 %s115, 1
      %p119 = scmp.eq.s32.totalorder %s20, 1
      %p120 = scmp.ne.s32.totalorder %s115, %s117
      %p121 = scmp.eq.s32.totalorder %s20, 0
      %p122 = por %p120, %p121
      %p123 = scmp.ne.s32.totalorder %s115, %s117
      %p124 = scmp.eq.s32.totalorder %s25, 1
      %p125 = por %p123, %p124
      %p126 = scmp.ne.s32.totalorder %s117, %s118
      %p127 = scmp.eq.s32.totalorder %s25, 0
      %p128 = por %p126, %p127
      %p129 = scmp.ne.s32.totalorder %s117, %s118
      %p130 = scmp.eq.s32.totalorder %s26, 1
      %p131 = por %p129, %p130
      %p133 = scmp.ne.s32.totalorder %s118, %s132
      %p134 = scmp.eq.s32.totalorder %s26, 0
      %p135 = por %p133, %p134
      %s137 = sadd.s32 %s136, 1
      %p140 = scmp.eq.s32.totalorder %s20, 1
      %p141 = scmp.ne.s32.totalorder %s136, %s138
      %p142 = scmp.eq.s32.totalorder %s20, 0
      %p143 = por %p141, %p142
      %p144 = scmp.ne.s32.totalorder %s136, %s138
      %p145 = scmp.eq.s32.totalorder %s25, 1
      %p146 = por %p144, %p145
      %p147 = scmp.ne.s32.totalorder %s138, %s139
      %p148 = scmp.eq.s32.totalorder %s25, 0
      %p149 = por %p147, %p148
      %p150 = scmp.ne.s32.totalorder %s138, %s139
      %p151 = scmp.eq.s32.totalorder %s26, 1
      %p152 = por %p150, %p151
      %p154 = scmp.ne.s32.totalorder %s139, %s153
      %p155 = scmp.eq.s32.totalorder %s26, 0
      %p156 = por %p154, %p155
      %s158 = sadd.s32 %s157, 1
      %p161 = scmp.eq.s32.totalorder %s20, 1
      %p162 = scmp.ne.s32.totalorder %s157, %s159
      %p163 = scmp.eq.s32.totalorder %s20, 0
      %p164 = por %p162, %p163
      %p165 = scmp.ne.s32.totalorder %s157, %s159
      %p166 = scmp.eq.s32.totalorder %s25, 1
      %p167 = por %p165, %p166
      %p168 = scmp.ne.s32.totalorder %s159, %s160
      %p169 = scmp.eq.s32.totalorder %s25, 0
      %p170 = por %p168, %p169
      %p171 = scmp.ne.s32.totalorder %s159, %s160
      %p172 = scmp.eq.s32.totalorder %s26, 1
      %p173 = por %p171, %p172
      %p175 = scmp.ne.s32.totalorder %s160, %s174
      %p176 = scmp.eq.s32.totalorder %s26, 0
      %p177 = por %p175, %p176
      %s179 = sadd.s32 %s178, 1
      %p182 = scmp.eq.s32.totalorder %s20, 1
      %p183 = scmp.ne.s32.totalorder %s178, %s180
      %p184 = scmp.eq.s32.totalorder %s20, 0
      %p185 = por %p183, %p184
      %p186 = scmp.ne.s32.totalorder %s178, %s180
      %p187 = scmp.eq.s32.totalorder %s25, 1
      %p188 = por %p186, %p187
      %p189 = scmp.ne.s32.totalorder %s180, %s181
      %p190 = scmp.eq.s32.totalorder %s25, 0
      %p191 = por %p189, %p190
      %p192 = scmp.ne.s32.totalorder %s180, %s181
      %p193 = scmp.eq.s32.totalorder %s26, 1
      %p194 = por %p192, %p193
      %p196 = scmp.ne.s32.totalorder %s181, %s195
      %p197 = scmp.eq.s32.totalorder %s26, 0
      %p198 = por %p196, %p197
      %s200 = sadd.s32 %s199, 1
      %p203 = scmp.eq.s32.totalorder %s20, 1
      %p204 = scmp.ne.s32.totalorder %s199, %s201
      %p205 = scmp.eq.s32.totalorder %s20, 0
      %p206 = por %p204, %p205
      %p207 = scmp.ne.s32.totalorder %s199, %s201
      %p208 = scmp.eq.s32.totalorder %s25, 1
      %p209 = por %p207, %p208
      %p210 = scmp.ne.s32.totalorder %s201, %s202
      %p211 = scmp.eq.s32.totalorder %s25, 0
      %p212 = por %p210, %p211
      %p213 = scmp.ne.s32.totalorder %s201, %s202
      %p214 = scmp.eq.s32.totalorder %s26, 1
      %p215 = por %p213, %p214
      %p217 = scmp.ne.s32.totalorder %s202, %s216
      %p218 = scmp.eq.s32.totalorder %s26, 0
      %p219 = por %p217, %p218
      %s220 = ssub.s32 %s27, %s39
      %s221 = ssub.s32 %s28, %s35
      %s222 = sor.u32 %s220, %s221
      %p223 = scmp.eq.s32.totalorder %s222, 0
      %s225 = sadd.s32 %s224, 1
      %s226 = scalar_select %p223, %s224, %s225
      %p229 = pneg %p223
      %p230 = scmp.eq.s32.totalorder %s20, 1
      %p231 = por %p229, %p230
      %p232 = scmp.ne.s32.totalorder %s224, %s227
      %p233 = scmp.eq.s32.totalorder %s20, 0
      %p234 = por %p232, %p233
      %p235 = scmp.ne.s32.totalorder %s224, %s227
      %p236 = scmp.eq.s32.totalorder %s25, 1
      %p237 = por %p235, %p236
      %p238 = scmp.ne.s32.totalorder %s227, %s228
      %p239 = scmp.eq.s32.totalorder %s25, 0
      %p240 = por %p238, %p239
      %p241 = scmp.ne.s32.totalorder %s227, %s228
      %p242 = scmp.eq.s32.totalorder %s26, 1
      %p243 = por %p241, %p242
      %p245 = scmp.ne.s32.totalorder %s228, %s244
      %p246 = scmp.eq.s32.totalorder %s26, 0
      %p247 = por %p245, %p246
      %s248 = ssub.s32 %s27, %s39
      %s249 = ssub.s32 %s28, %s35
      %s250 = sor.u32 %s248, %s249
      %p251 = scmp.eq.s32.totalorder %s250, 0
      %s253 = sadd.s32 %s252, 1
      %s254 = scalar_select %p251, %s252, %s253
      %p257 = pneg %p251
      %p258 = scmp.eq.s32.totalorder %s20, 1
      %p259 = por %p257, %p258
      %p260 = scmp.ne.s32.totalorder %s252, %s255
      %p261 = scmp.eq.s32.totalorder %s20, 0
      %p262 = por %p260, %p261
      %p263 = scmp.ne.s32.totalorder %s252, %s255
      %p264 = scmp.eq.s32.totalorder %s25, 1
      %p265 = por %p263, %p264
      %p266 = scmp.ne.s32.totalorder %s255, %s256
      %p267 = scmp.eq.s32.totalorder %s25, 0
      %p268 = por %p266, %p267
      %p269 = scmp.ne.s32.totalorder %s255, %s256
      %p270 = scmp.eq.s32.totalorder %s26, 1
      %p271 = por %p269, %p270
      %p273 = scmp.ne.s32.totalorder %s256, %s272
      %p274 = scmp.eq.s32.totalorder %s26, 0
      %p275 = por %p273, %p274
      %p276 = scmp.le.s32.totalorder 1, %s20
      %p277 = scmp.lt.s32.totalorder %s20, 3
      %p278 = pnand %p276, %p277
      %p279 = pneg %p278
      // Predicated region
      $region9: #{svso_forward.1} parent=5 // pred_check
        _
      $region10: #{svso_forward.1} parent=5 // pred_check_branch
        %281 = sbr.rel (%p278) target = $region12
      $region11: #{svso_forward.1} parent=5 // pred_region
        %s282 = ssub.s32 %s20, 1
        // Predicated region
        $region13: #{svso_forward.1} parent=11 // pred_check
          %p283 = pneg %p107
        $region14: #{svso_forward.1} parent=11 // pred_check_branch
          %285 = sbr.rel (%p283) target = $region16
        $region15: #{svso_forward.1} parent=11 // pred_region
          _
        $region16: #{svso_forward.1} parent=11 // pred_fallthru
          _
        // Predicated region
        $region17: #{svso_forward.1} parent=11 // pred_check
          %p286 = pneg %p128
        $region18: #{svso_forward.1} parent=11 // pred_check_branch
          %288 = sbr.rel (%p286) target = $region20
        $region19: #{svso_forward.1} parent=11 // pred_region
          _
        $region20: #{svso_forward.1} parent=11 // pred_fallthru
          _
        // Predicated region
        $region21: #{svso_forward.1} parent=11 // pred_check
          %p289 = pneg %p149
        $region22: #{svso_forward.1} parent=11 // pred_check_branch
          %291 = sbr.rel (%p289) target = $region24
        $region23: #{svso_forward.1} parent=11 // pred_region
          %s293 = ssub.s32 64, 64
          %294 = vsyncadd [#allocation4], %s293
          %s296 = sshll.u32 [#allocation3], 4
          %s297 = int_to_ptr.vmem [resolvable:$true] %s296
          %299 = dma.hbm_to_vmem [thread:$0]  %s4, 64, %s297, [#allocation4]
        $region24: #{svso_forward.1} parent=11 // pred_fallthru
          _
        // Predicated region
        $region25: #{svso_forward.1} parent=11 // pred_check
          %p300 = pneg %p170
        $region26: #{svso_forward.1} parent=11 // pred_check_branch
          %302 = sbr.rel (%p300) target = $region28
        $region27: #{svso_forward.1} parent=11 // pred_region
          %s304 = ssub.s32 256, 256
          %305 = vsyncadd [#allocation6], %s304
          %s306 = sshll.u32 [#allocation5], 4
          %s307 = int_to_ptr.vmem [resolvable:$true] %s306
          %312 = dma.hbm_to_vmem [thread:$0]  %s5, 256, %s307, [#allocation6], 64, 64, 4
        $region28: #{svso_forward.1} parent=11 // pred_fallthru
          _
        // Predicated region
        $region29: #{svso_forward.1} parent=11 // pred_check
          %p313 = pneg %p191
        $region30: #{svso_forward.1} parent=11 // pred_check_branch
          %315 = sbr.rel (%p313) target = $region32
        $region31: #{svso_forward.1} parent=11 // pred_region
          %s317 = ssub.s32 32, 32
          %318 = vsyncadd [#allocation6], %s317
          %s320 = sshll.u32 [#allocation7], 4
          %s321 = int_to_ptr.vmem [resolvable:$true] %s320
          %323 = dma.hbm_to_vmem [thread:$0]  %s6, 32, %s321, [#allocation6]
        $region32: #{svso_forward.1} parent=11 // pred_fallthru
          _
        // Predicated region
        $region33: #{svso_forward.1} parent=11 // pred_check
          %p324 = pneg %p212
        $region34: #{svso_forward.1} parent=11 // pred_check_branch
          %326 = sbr.rel (%p324) target = $region36
        $region35: #{svso_forward.1} parent=11 // pred_region
          _
        $region36: #{svso_forward.1} parent=11 // pred_fallthru
          _
      $region12: #{svso_forward.1} parent=5 // pred_fallthru
        _
      %p327 = scmp.lt.s32.totalorder %s20, 2
      // Predicated region
      $region37: #{svso_forward.1} parent=5 // pred_check
        %p328 = pneg %p327
      $region38: #{svso_forward.1} parent=5 // pred_check_branch
        %330 = sbr.rel (%p328) target = $region40
      $region39: #{svso_forward.1} parent=5 // pred_region
        // Predicated region
        $region41: #{svso_forward.1} parent=39 // pred_check
          %p331 = pneg %p54
        $region42: #{svso_forward.1} parent=39 // pred_check_branch
          %333 = sbr.rel (%p331) target = $region44
        $region43: #{svso_forward.1} parent=39 // pred_region
          %p334 = scmp.lt.s32.totalorder %s27, 1
          %s335 = scalar_select %p334, %s27, 1
          %p336 = scmp.lt.s32.totalorder %s28, 0
          %s337 = scalar_select %p336, %s28, 0
          %s338 = sadd.s32 %s337, %s335
          %s339 = smul.addr %s338, 8
          %s340 = scalar_lea.vmem %s0, %s339
        $region44: #{svso_forward.1} parent=39 // pred_fallthru
          _
        // Predicated region
        $region45: #{svso_forward.1} parent=39 // pred_check
          %p341 = pneg %p80
        $region46: #{svso_forward.1} parent=39 // pred_check_branch
          %343 = sbr.rel (%p341) target = $region48
        $region47: #{svso_forward.1} parent=39 // pred_region
          %p344 = scmp.lt.s32.totalorder %s27, 1
          %s345 = scalar_select %p344, %s27, 1
          %s346 = scalar_lea.vmem %s1, %s345
        $region48: #{svso_forward.1} parent=39 // pred_fallthru
          _
      $region40: #{svso_forward.1} parent=5 // pred_fallthru
        _
      %p347 = scmp.le.s32.totalorder 1, %s20
      %p348 = scmp.lt.s32.totalorder %s20, 3
      %p349 = pnand %p347, %p348
      %p350 = pneg %p349
      // Predicated region
      $region49: #{svso_forward.1} parent=5 // pred_check
        _
      $region50: #{svso_forward.1} parent=5 // pred_check_branch
        %352 = sbr.rel (%p349) target = $region52
      $region51: #{svso_forward.1} parent=5 // pred_region
        %s353 = ssub.s32 %s20, 1
        // Predicated region
        $region53: #{svso_forward.1} parent=51 // pred_check
          %p354 = pneg %p149
        $region54: #{svso_forward.1} parent=51 // pred_check_branch
          %356 = sbr.rel (%p354) target = $region56
        $region55: #{svso_forward.1} parent=51 // pred_region
          %357 = dma.done [#allocation4], 64
        $region56: #{svso_forward.1} parent=51 // pred_fallthru
          _
        // Predicated region
        $region57: #{svso_forward.1} parent=51 // pred_check
          %p358 = pneg %p170
        $region58: #{svso_forward.1} parent=51 // pred_check_branch
          %360 = sbr.rel (%p358) target = $region60
        $region59: #{svso_forward.1} parent=51 // pred_region
          %361 = dma.done [#allocation6], 256
        $region60: #{svso_forward.1} parent=51 // pred_fallthru
          _
        // Predicated region
        $region61: #{svso_forward.1} parent=51 // pred_check
          %p362 = pneg %p191
        $region62: #{svso_forward.1} parent=51 // pred_check_branch
          %364 = sbr.rel (%p362) target = $region64
        $region63: #{svso_forward.1} parent=51 // pred_region
          %365 = dma.done [#allocation6], 32
        $region64: #{svso_forward.1} parent=51 // pred_fallthru
          _
        %p366 = scmp.lt.s32.totalorder %s29, 1
        %s367 = scalar_select %p366, %s29, 1
        %p368 = scmp.lt.s32.totalorder %s30, 0
        %s369 = scalar_select %p368, %s30, 0
        %s370 = sadd.s32 %s369, %s367
        %s371 = smul.addr %s370, 8
        %s372 = scalar_lea.vmem %s0, %s371
        %p373 = pneg %p60
        %p374 = pneg %p57
        %p375 = scmp.lt.s32.totalorder %s29, 1
        %s376 = scalar_select %p375, %s29, 1
        %s377 = scalar_lea.vmem %s1, %s376
        %p378 = pneg %p86
        %p379 = pneg %p83
        %p380 = pneg %p107
        %p381 = pneg %p104
        %p382 = pneg %p128
        %p383 = pneg %p125
        %p384 = pneg %p149
        %p385 = pneg %p146
        %p386 = pneg %p170
        %p387 = pneg %p167
        %p388 = pneg %p191
        %p389 = pneg %p188
        %p390 = pneg %p212
        %p391 = pneg %p209
        %p392 = pneg %p240
        %p393 = pneg %p237
        %p394 = scmp.lt.s32.totalorder %s29, 1
        %s395 = scalar_select %p394, %s29, 1
        %p396 = scmp.lt.s32.totalorder %s30, 0
        %s397 = scalar_select %p396, %s30, 0
        %s398 = sadd.s32 %s397, %s395
        %s399 = smul.addr %s398, 8
        %s400 = scalar_lea.vmem %s8, %s399
        %p401 = pneg %p268
        %p402 = pneg %p265
        %p403 = scmp.lt.s32.totalorder %s29, 1
        %s404 = scalar_select %p403, %s29, 1
        %p405 = scmp.lt.s32.totalorder %s30, 0
        %s406 = scalar_select %p405, %s30, 0
        %s407 = sadd.s32 %s406, %s404
        %s408 = smul.addr %s407, 8
        %s409 = scalar_lea.vmem %s9, %s408
        %p410 = scmp.lt.s32.totalorder %s29, 1
        %s411 = scalar_select %p410, %s29, 1
        %p412 = scmp.lt.s32.totalorder %s30, 0
        %s413 = scalar_select %p412, %s30, 0
        %s414 = sadd.s32 %s413, %s411
        %s415 = smul.addr %s414, 8
        %s416 = scalar_lea.vmem %s0, %s415
        %p417 = scmp.lt.s32.totalorder %s29, 1
        %s418 = scalar_select %p417, %s29, 1
        %s419 = scalar_lea.vmem %s1, %s418
        %p420 = scmp.lt.s32.totalorder %s29, 1
        %s421 = scalar_select %p420, %s29, 1
        %p422 = scmp.lt.s32.totalorder %s30, 0
        %s423 = scalar_select %p422, %s30, 0
        %s424 = sadd.s32 %s423, %s421
        %s425 = smul.addr %s424, 8
        %s426 = scalar_lea.vmem %s8, %s425
        %p427 = scmp.lt.s32.totalorder %s29, 1
        %s428 = scalar_select %p427, %s29, 1
        %p429 = scmp.lt.s32.totalorder %s30, 0
        %s430 = scalar_select %p429, %s30, 0
        %s431 = sadd.s32 %s430, %s428
        %s432 = smul.addr %s431, 8
        %s433 = scalar_lea.vmem %s9, %s432
        %v435 = vld [vmem:[%s416] sm:$0xff]
        %v436 = vpack.c.bf16 %v435, %v435
        %v437 = vld [vmem:[%s419] sm:$0x1]
        %v438 = vpack.c.bf16 %v437, %v437
        %v439 = vld [vmem:[#allocation3] sm:$0x7]
        %v440 = vld [vmem:[%s3] sm:$0xf]
        %v441 = vld [vmem:[%s3 + $0x4] sm:$0xf]
        %v442 = vld [vmem:[%s3 + $0x8] sm:$0xf]
        %v443 = vld [vmem:[%s3 + $0xc] sm:$0xf]
        %v448 = vunpack.c.l.b16 %v440
        %v449 = vunpack.c.l.b16 %v441
        %v450 = vunpack.c.l.b16 %v442
        %v451 = vunpack.c.l.b16 %v443
        %v452 = vpack.c.b16 %v449, %v448
        %v453 = vpack.c.b16 %v451, %v450
        %vm456 = vcmask 261120
        %v458 = vsel %vm456, %v438, 0
        %460 = vmatprep.subr.bf16.mxu0 0
        %461 = vmatpush1.bf16.msra.mxu0 %v452
        %462 = vmatprep.subr.bf16.mxu0 0
        %463 = vmatpush1.bf16.msra.mxu0 %v453
        %464 = vmatprep.subr.bf16.mxu0 0
        %465 = vmatpush1.bf16.msra.mxu0 0
        %466 = vmatprep.subr.bf16.mxu0 0
        %467 = vmatpush1.bf16.msra.mxu0 0
        %468 = vmatprep.subr.bf16.mxu0 0
        %469 = vmatpush1.bf16.msra.mxu0 0
        %470 = vmatprep.subr.bf16.mxu0 0
        %471 = vmatpush1.bf16.msra.mxu0 0
        %472 = vmatprep.subr.bf16.mxu0 0
        %473 = vmatpush1.bf16.msra.mxu0 0
        %474 = vmatprep.subr.bf16.mxu0 0
        %475 = vmatpush1.bf16.msra.mxu0 0
        %476 = vmatprep.subr.bf16.mxu0 0
        %477 = vmatpush1.bf16.msra.mxu0 0
        %478 = vmatprep.subr.bf16.mxu0 0
        %479 = vmatpush1.bf16.msra.mxu0 0
        %480 = vmatprep.subr.bf16.mxu0 0
        %481 = vmatpush1.bf16.msra.mxu0 0
        %482 = vmatprep.subr.bf16.mxu0 0
        %483 = vmatpush1.bf16.msra.mxu0 0
        %484 = vmatprep.subr.bf16.mxu0 0
        %485 = vmatpush1.bf16.msra.mxu0 0
        %486 = vmatprep.subr.bf16.mxu0 0
        %487 = vmatpush1.bf16.msra.mxu0 0
        %488 = vmatprep.subr.bf16.mxu0 0
        %489 = vmatpush1.bf16.msra.mxu0 0
        %490 = vmatprep.subr.bf16.mxu0 0
        %491 = vmatpush1.bf16.msra.mxu0 0
        %492 = vmatprep.mubr.bf16.mxu0 0
        %493 = vmatmul.mubr.bf16.gmra.mrb[0].mxu0 %v458
        %v494 = vpop.f32.mrb[0].mxu0
        %v495 = vadd.f32 %v439, %v494
        %v496 = vpop.f32.mrb[0].mxu0
        %v497 = vpop.f32.mrb[0].mxu0
        %v498 = vpop.f32.mrb[0].mxu0
        %499 = vdwg.mxu0
        %v500 = vld [vmem:[%s2] sm:$0xf]
        %v501 = vld [vmem:[%s2 + $0x4] sm:$0xf]
        %v502 = vld [vmem:[%s2 + $0x8] sm:$0xf]
        %v503 = vld [vmem:[%s2 + $0xc] sm:$0xf]
        %v504 = vlaneseq
        %v505 = vshrl.u32 %v504, 7
        %v506 = vsub.s32 0, %v505
        %v507 = vrot.slane %v495, %v506
        %v512 = vunpack.c.l.b16 %v500
        %v513 = vunpack.c.l.b16 %v501
        %v514 = vunpack.c.l.b16 %v502
        %v515 = vunpack.c.l.b16 %v503
        %v516 = vpack.c.b16 %v513, %v512
        %v517 = vpack.c.b16 %v515, %v514
        %v521 = vsel %vm456, %v436, 0
        %523 = vmatprep.subr.bf16.mxu0 0
        %524 = vmatpush1.bf16.msra.mxu0 %v516
        %525 = vmatprep.subr.bf16.mxu0 0
        %526 = vmatpush1.bf16.msra.mxu0 %v517
        %527 = vmatprep.subr.bf16.mxu0 0
        %528 = vmatpush1.bf16.msra.mxu0 0
        %529 = vmatprep.subr.bf16.mxu0 0
        %530 = vmatpush1.bf16.msra.mxu0 0
        %531 = vmatprep.subr.bf16.mxu0 0
        %532 = vmatpush1.bf16.msra.mxu0 0
        %533 = vmatprep.subr.bf16.mxu0 0
        %534 = vmatpush1.bf16.msra.mxu0 0
        %535 = vmatprep.subr.bf16.mxu0 0
        %536 = vmatpush1.bf16.msra.mxu0 0
        %537 = vmatprep.subr.bf16.mxu0 0
        %538 = vmatpush1.bf16.msra.mxu0 0
        %539 = vmatprep.subr.bf16.mxu0 0
        %540 = vmatpush1.bf16.msra.mxu0 0
        %541 = vmatprep.subr.bf16.mxu0 0
        %542 = vmatpush1.bf16.msra.mxu0 0
        %543 = vmatprep.subr.bf16.mxu0 0
        %544 = vmatpush1.bf16.msra.mxu0 0
        %545 = vmatprep.subr.bf16.mxu0 0
        %546 = vmatpush1.bf16.msra.mxu0 0
        %547 = vmatprep.subr.bf16.mxu0 0
        %548 = vmatpush1.bf16.msra.mxu0 0
        %549 = vmatprep.subr.bf16.mxu0 0
        %550 = vmatpush1.bf16.msra.mxu0 0
        %551 = vmatprep.subr.bf16.mxu0 0
        %552 = vmatpush1.bf16.msra.mxu0 0
        %553 = vmatprep.subr.bf16.mxu0 0
        %554 = vmatpush1.bf16.msra.mxu0 0
        %555 = vmatprep.mubr.bf16.mxu0 0
        %556 = vmatmul.mubr.bf16.gmra.mrb[0].mxu0 %v521
        %v557 = vpop.f32.mrb[0].mxu0
        %v558 = vadd.f32 %v507, %v557
        %v559 = vpop.f32.mrb[0].mxu0
        %v560 = vpop.f32.mrb[0].mxu0
        %v561 = vpop.f32.mrb[0].mxu0
        %562 = vdwg.mxu0
        %563 = vst.msk [vmem:[%s426] sm:$0xff] %vm456, %v558
        %v564 = vlaneseq
        %v565 = vshrl.u32 %v564, 7
        %v566 = vsub.s32 1, %v565
        %v567 = vrot.slane %v439, %v566
        %v568 = vmul.f32 %v558, %v567
        %v569 = vlaneseq
        %v570 = vshrl.u32 %v569, 7
        %v571 = vsub.s32 2, %v570
        %v572 = vrot.slane %v439, %v571
        %v573 = vadd.f32 %v568, %v572
        %v574 = vmax.f32 %v573, 0.0
        %v575 = vpack.c.bf16 %v574, %v574
        %v576 = vld [vmem:[#allocation5] sm:$0xf]
        %v577 = vld [vmem:[#allocation5 + $0x4] sm:$0xf]
        %v578 = vld [vmem:[#allocation5 + $0x8] sm:$0xf]
        %v579 = vld [vmem:[#allocation5 + $0xc] sm:$0xf]
        %v580 = vld [vmem:[#allocation7] sm:$0x3]
        %v581 = vlaneseq
        %v582 = vshrl.u32 %v581, 7
        %v583 = vsub.s32 0, %v582
        %v584 = vrot.slane %v580, %v583
        %v589 = vunpack.c.l.b16 %v576
        %v590 = vunpack.c.l.b16 %v577
        %v591 = vunpack.c.l.b16 %v578
        %v592 = vunpack.c.l.b16 %v579
        %v593 = vpack.c.b16 %v590, %v589
        %v594 = vpack.c.b16 %v592, %v591
        %v598 = vsel %vm456, %v575, 0
        %600 = vmatprep.subr.bf16.mxu0 0
        %601 = vmatpush1.bf16.msra.mxu0 %v593
        %602 = vmatprep.subr.bf16.mxu0 0
        %603 = vmatpush1.bf16.msra.mxu0 %v594
        %604 = vmatprep.subr.bf16.mxu0 0
        %605 = vmatpush1.bf16.msra.mxu0 0
        %606 = vmatprep.subr.bf16.mxu0 0
        %607 = vmatpush1.bf16.msra.mxu0 0
        %608 = vmatprep.subr.bf16.mxu0 0
        %609 = vmatpush1.bf16.msra.mxu0 0
        %610 = vmatprep.subr.bf16.mxu0 0
        %611 = vmatpush1.bf16.msra.mxu0 0
        %612 = vmatprep.subr.bf16.mxu0 0
        %613 = vmatpush1.bf16.msra.mxu0 0
        %614 = vmatprep.subr.bf16.mxu0 0
        %615 = vmatpush1.bf16.msra.mxu0 0
        %616 = vmatprep.subr.bf16.mxu0 0
        %617 = vmatpush1.bf16.msra.mxu0 0
        %618 = vmatprep.subr.bf16.mxu0 0
        %619 = vmatpush1.bf16.msra.mxu0 0
        %620 = vmatprep.subr.bf16.mxu0 0
        %621 = vmatpush1.bf16.msra.mxu0 0
        %622 = vmatprep.subr.bf16.mxu0 0
        %623 = vmatpush1.bf16.msra.mxu0 0
        %624 = vmatprep.subr.bf16.mxu0 0
        %625 = vmatpush1.bf16.msra.mxu0 0
        %626 = vmatprep.subr.bf16.mxu0 0
        %627 = vmatpush1.bf16.msra.mxu0 0
        %628 = vmatprep.subr.bf16.mxu0 0
        %629 = vmatpush1.bf16.msra.mxu0 0
        %630 = vmatprep.subr.bf16.mxu0 0
        %631 = vmatpush1.bf16.msra.mxu0 0
        %632 = vmatprep.mubr.bf16.mxu0 0
        %633 = vmatmul.mubr.bf16.gmra.mrb[0].mxu0 %v598
        %v634 = vpop.f32.mrb[0].mxu0
        %v635 = vadd.f32 %v584, %v634
        %v636 = vpop.f32.mrb[0].mxu0
        %v637 = vpop.f32.mrb[0].mxu0
        %v638 = vpop.f32.mrb[0].mxu0
        %639 = vdwg.mxu0
        %v640 = vmax.f32 %v635, 0.0
        %v641 = vlaneseq
        %v642 = vshrl.u32 %v641, 7
        %v643 = vsub.s32 1, %v642
        %v644 = vrot.slane %v580, %v643
        %v645 = vmul.f32 %v640, %v644
        %vm646 = vcmask 130048
        %v647 = vsel %vm646, %v645, 0.0
        %648 = vadd.xlane.f32.xlu0 %v647
        %v649 = vpop.xlane.xlu0 %648
        %v650 = vld [vmem:[#allocation2] sm:$0x1]
        %v652 = vlaneseq
        %v653 = vshrl.u32 %v652, 7
        %v654 = vsub.s32 0, %v653
        %v655 = vrot.slane %v650, %v654
        %v657 = vadd.f32 %v649, %v655
        %vm658 = vcmask 7168
        %659 = vst.msk [vmem:[%s433] sm:$0xff] %vm658, %v657
        %p660 = scmp.lt.s32.totalorder %s29, 1
        %s661 = scalar_select %p660, %s29, 1
        %p662 = scmp.lt.s32.totalorder %s30, 0
        %s663 = scalar_select %p662, %s30, 0
        %s664 = sadd.s32 %s663, %s661
        %s665 = smul.addr %s664, 8
        %s666 = scalar_lea.vmem %s8, %s665
        %p667 = scmp.lt.s32.totalorder %s29, 1
        %s668 = scalar_select %p667, %s29, 1
        %p669 = scmp.lt.s32.totalorder %s30, 0
        %s670 = scalar_select %p669, %s30, 0
        %s671 = sadd.s32 %s670, %s668
        %s672 = smul.addr %s671, 8
        %s673 = scalar_lea.vmem %s9, %s672
        // Predicated region
        $region65: #{svso_forward.1} parent=51 // pred_check
          %p674 = pneg %p237
        $region66: #{svso_forward.1} parent=51 // pred_check_branch
          %676 = sbr.rel (%p674) target = $region68
        $region67: #{svso_forward.1} parent=51 // pred_region
          _
        $region68: #{svso_forward.1} parent=51 // pred_fallthru
          _
        // Predicated region
        $region69: #{svso_forward.1} parent=51 // pred_check
          %p677 = pneg %p265
        $region70: #{svso_forward.1} parent=51 // pred_check_branch
          %679 = sbr.rel (%p677) target = $region72
        $region71: #{svso_forward.1} parent=51 // pred_region
          _
        $region72: #{svso_forward.1} parent=51 // pred_fallthru
          _
      $region52: #{svso_forward.1} parent=5 // pred_fallthru
        _
      %p680 = scmp.le.s32.totalorder 2, %s20
      // Predicated region
      $region73: #{svso_forward.1} parent=5 // pred_check
        %p681 = pneg %p680
      $region74: #{svso_forward.1} parent=5 // pred_check_branch
        %683 = sbr.rel (%p681) target = $region76
      $region75: #{svso_forward.1} parent=5 // pred_region
        %s684 = ssub.s32 %s20, 2
        // Predicated region
        $region77: #{svso_forward.1} parent=75 // pred_check
          %p685 = pneg %p243
        $region78: #{svso_forward.1} parent=75 // pred_check_branch
          %687 = sbr.rel (%p685) target = $region80
        $region79: #{svso_forward.1} parent=75 // pred_region
          %p688 = scmp.lt.s32.totalorder %s31, 1
          %s689 = scalar_select %p688, %s31, 1
          %p690 = scmp.lt.s32.totalorder %s32, 0
          %s691 = scalar_select %p690, %s32, 0
          %s692 = sadd.s32 %s691, %s689
          %s693 = smul.addr %s692, 8
          %s694 = scalar_lea.vmem %s8, %s693
        $region80: #{svso_forward.1} parent=75 // pred_fallthru
          _
        // Predicated region
        $region81: #{svso_forward.1} parent=75 // pred_check
          %p695 = pneg %p271
        $region82: #{svso_forward.1} parent=75 // pred_check_branch
          %697 = sbr.rel (%p695) target = $region84
        $region83: #{svso_forward.1} parent=75 // pred_region
          %p698 = scmp.lt.s32.totalorder %s31, 1
          %s699 = scalar_select %p698, %s31, 1
          %p700 = scmp.lt.s32.totalorder %s32, 0
          %s701 = scalar_select %p700, %s32, 0
          %s702 = sadd.s32 %s701, %s699
          %s703 = smul.addr %s702, 8
          %s704 = scalar_lea.vmem %s9, %s703
        $region84: #{svso_forward.1} parent=75 // pred_fallthru
          _
      $region76: #{svso_forward.1} parent=5 // pred_fallthru
        _
    $region6: #{svso_forward.1} parent=1 // loop_footer
      %s24 = sadd.s32 1, %s20
    $region7: #{svso_forward.1} parent=1 // loop_footer_branch
      %19 = sbr.rel target = $region3
    $region8: #{svso_forward.1} parent=1 // loop_exit
      _
    %705 = vsyncpa [#allocation4], 1
    %s706 = scalar_lea.sflag [#allocation4], 1
    %707 = vsyncpa %s706, 1
    %708 = vsyncpa [#allocation6], 1

</llo_original>
